<compile_context>
chip_gen: v5e
topology: v5e:2x2
jax: 0.10.0
libtpu: 0.0.40
codegen_flags: <defaults>
</compile_context>

<pallas_src>
import math

import jax
import jax.numpy as jnp
from jax.experimental import pallas as pl
from jax.experimental.pallas import tpu as pltpu

_LANE = 1024            # lane-dense last dim (multiple of 128)
_MAX_BLOCK_ROWS = 512   # (512, 1024) f32 block = 2 MiB/step (1 MiB for bf16)
_MIN_PALLAS_ELEMS = 1 << 20  # below this, XLA's fused reduce is already roofline


def _num_tensorcores():
    """2 for dual-TensorCore chips (v4 / v5p / v7x megacore), else 1."""
    try:
        kind = jax.devices()[0].device_kind.lower()
    except Exception:
        return 1
    if "v7" in kind or "v5p" in kind or ("v4" in kind and "lite" not in kind):
        return 2
    return 1


def _sumsq_kernel(z_ref, out_ref, acc_ref):
    # z_ref:   (block_rows, _LANE) tile of the flattened z slab
    # out_ref: (8, 128) lane-dense partial-sum block for this parallel slice
    # acc_ref: (8, _LANE) f32 accumulator, persistent across the k axis
    k = pl.program_id(1)

    @pl.when(k == 0)
    def _():
        acc_ref[...] = jnp.zeros_like(acc_ref)

    # Per-tile upcast keeps bf16 inputs at bf16 width on the HBM path.
    z = z_ref[...].astype(jnp.float32)
    zz = z * z
    block_rows = z_ref.shape[0]
    # Fold sublane groups down to a single (8, _LANE) tile: pure VPU adds
    # (the reshape preserves the (8,128) tiling), one 32 KiB store per step.
    acc_ref[...] += jnp.sum(zz.reshape(block_rows // 8, 8, _LANE), axis=0)

    @pl.when(k == pl.num_programs(1) - 1)
    def _():
        # Single small cross-lane (XLU) reduce per parallel slice, done once.
        psum = jnp.sum(acc_ref[...])
        out_ref[...] = jnp.full((8, 128), psum, dtype=jnp.float32)


def negative_likelihood_loss(z, logdet, sigma=0.1, *,
                             min_pallas_elems=_MIN_ALLAS_ELEMS if False else _MIN_PALLAS_ELEMS):
    """Pallas TPU implementation of NegativeLikelihoodLoss.forward (NCHW z)."""
    n, c, h, w = z.shape
    chw = c * h * w
    total = n * chw
    gauss_constant = 0.5 * float(math.log(2.0 * math.pi)) + float(math.log(sigma))
    denom = float(chw) * float(n)
    logdet_sum = jnp.sum(logdet.astype(jnp.float32))

    flat = z.reshape(-1)

    num_parallel = _num_tensorcores()
    rows = total // _LANE
    rows_per_slice = rows // num_parallel
    block_rows = min(_MAX_BLOCK_ROWS, (rows_per_slice // 8) * 8)

    if total < min_pallas_elems or block_rows < 8:
        # Small-input short-circuit: grid/launch overhead would dominate.
        sumsq = jnp.sum(flat.astype(jnp.float32) ** 2)
    else:
        num_k = rows_per_slice // block_rows
        main_rows = num_parallel * num_k * block_rows
        main_elems = main_rows * _LANE
        # Aligned prefix only — no padded copy of z is materialized.
        z2d = flat[:main_elems].reshape(main_rows, _LANE)

        # TODO(synk): on v7x, verify the leading "parallel" axis actually shards
        # across both TensorCores; if not, switch it to pltpu.CORE_PARALLEL.
        partials = pl.pallas_call(
            _sumsq_kernel,
            out_shape=jax.ShapeDtypeStruct((num_parallel * 8, 128), jnp.float32),
            grid_spec=pltpu.PrefetchScalarGridSpec(
                num_scalar_prefetch=0,
                grid=(num_parallel, num_k),
                in_specs=[
                    pl.BlockSpec((block_rows, _LANE),
                                 lambda p, k: (p * num_k + k, 0)),
                ],
                out_specs=pl.BlockSpec((8, 128), lambda p, k: (p, 0)),
                scratch_shapes=[pltpu.VMEM((8, _LANE), jnp.float32)],
            ),
            compiler_params=pltpu.CompilerParams(
                dimension_semantics=("parallel", "arbitrary")),
            cost_estimate=pl.CostEstimate(
                flops=2 * main_elems,
                transcendentals=0,
                bytes_accessed=int(z2d.dtype.itemsize) * main_elems
                + num_parallel * 8 * 128 * 4,
            ),
        )(z2d)

        # Each parallel slice replicated its scalar across its (8,128) block.
        sumsq = jnp.sum(partials[::8, 0])

        # Ragged tail: tiny jnp sum folded into the scalar combine.
        if main_elems != total:
            tail = flat[main_elems:].astype(jnp.float32)
            sumsq = sumsq + jnp.sum(tail * tail)

    # nll = -(objective + mean(logdet/CHW))
    #     = sumsq/(2 sigma^2 CHW N) + gauss_constant - sum(logdet)/(CHW N)
    nll = (sumsq / (2.0 * float(sigma) ** 2 * denom)
           + gauss_constant
           - logdet_sum / denom)
    return nll


def _reference(z, logdet, sigma=0.1):
    gauss_constant = 0.5 * float(math.log(2.0 * math.pi)) + float(math.log(sigma))
    n, c, h, w = z.shape
    chw = c * h * w
    objective = jnp.sum(
        -z.astype(jnp.float32) ** 2 / (2.0 * sigma ** 2) - gauss_constant,
        axis=(1, 2, 3),
    ) / float(chw)
    objective = jnp.mean(objective)
    logdet_m = jnp.mean(logdet.astype(jnp.float32) / float(chw))
    return -(objective + logdet_m)


if __name__ == "__main__":
    key = jax.random.PRNGKey(0)
    kz, kl, kz2, kl2 = jax.random.split(key, 4)

    # 1) Small shape consistent with the module: takes the short-circuit path.
    z_small = jax.random.normal(kz, (2, 4, 16, 16), dtype=jnp.float32) * 0.1
    ld_small = jax.random.normal(kl, (2,), dtype=jnp.float32)
    out_small = negative_likelihood_loss(z_small, ld_small, sigma=0.1)
    jax.block_until_ready(out_small)
    ref_small = _reference(z_small, ld_small, sigma=0.1)
    assert jnp.allclose(out_small, ref_small, rtol=1e-5, atol=1e-5), (out_small, ref_small)

    # 2) Modest shape forced through the Pallas kernel (includes a ragged tail).
    z_big = jax.random.normal(kz2, (2, 8, 36, 100), dtype=jnp.float32) * 0.1
    ld_big = jax.random.normal(kl2, (2,), dtype=jnp.float32)
    out_big = negative_likelihood_loss(z_big, ld_big, sigma=0.1, min_pallas_elems=0)
    jax.block_until_ready(out_big)
    ref_big = _reference(z_big, ld_big, sigma=0.1)
    assert jnp.allclose(out_big, ref_big, rtol=1e-5, atol=1e-5), (out_big, ref_big)

    print("KERNEL_OK")
</pallas_src>

<mosaic_0001>
module attributes {stable_mosaic.version = 11 : i64} {
  func.func @_sumsq_kernel(%arg0: i32, %arg1: i32, %arg2: memref<56x1024xf32, #tpu.memory_space<vmem>>, %arg3: memref<8x128xf32, #tpu.memory_space<vmem>>, %arg4: memref<8x1024xf32, #tpu.memory_space<vmem>>) attributes {dimension_semantics = [#tpu.dimension_semantics<parallel>, #tpu.dimension_semantics<arbitrary>], iteration_bounds = array<i64: 1, 1>, scalar_prefetch = 0 : i64, scratch_operands = 1 : i64, tpu.core_type = #tpu.core_type<tc>, window_params = [{transform_indices = @transform_0, window_bounds = array<i64: 56, 1024>}, {transform_indices = @transform_1, window_bounds = array<i64: 8, 128>}]} {
    %c0_i32 = arith.constant 0 : i32
    %0 = arith.cmpi eq, %arg1, %c0_i32 : i32
    %1 = arith.extui %0 : i1 to i32
    %c0_i32_0 = arith.constant 0 : i32
    %2 = arith.cmpi ne, %1, %c0_i32_0 : i32
    scf.if %2 {
      %cst_8 = arith.constant 0.000000e+00 : f32
      %13 = vector.broadcast %cst_8 : f32 to vector<8x1024xf32>
      %c0_9 = arith.constant 0 : index
      %c0_10 = arith.constant 0 : index
      %14 = vector.load %arg4[%c0_9, %c0_10] : memref<8x1024xf32, #tpu.memory_space<vmem>>, vector<8x1024xf32>
      tpu.vector_store %arg4[%c0_9, %c0_10], %13 {strides = array<i32>} : memref<8x1024xf32, #tpu.memory_space<vmem>>, vector<8x1024xf32>,
    } else {
    }
    %c0 = arith.constant 0 : index
    %c0_1 = arith.constant 0 : index
    %3 = vector.load %arg2[%c0, %c0_1] : memref<56x1024xf32, #tpu.memory_space<vmem>>, vector<56x1024xf32>
    %4 = arith.mulf %3, %3 : vector<56x1024xf32>
    %c0_2 = arith.constant 0 : index
    %c0_3 = arith.constant 0 : index
    %5 = vector.load %arg4[%c0_2, %c0_3] : memref<8x1024xf32, #tpu.memory_space<vmem>>, vector<8x1024xf32>
    %6 = vector.shape_cast %4 : vector<56x1024xf32> to vector<7x8x1024xf32>
    %cst = arith.constant dense<0.000000e+00> : vector<8x1024xf32>
    %7 = vector.multi_reduction <add>, %6, %cst [0] : vector<7x8x1024xf32> to vector<8x1024xf32>
    %8 = arith.addf %5, %7 : vector<8x1024xf32>
    %c0_4 = arith.constant 0 : index
    %c0_5 = arith.constant 0 : index
    %9 = vector.load %arg4[%c0_4, %c0_5] : memref<8x1024xf32, #tpu.memory_space<vmem>>, vector<8x1024xf32>
    tpu.vector_store %arg4[%c0_4, %c0_5], %8 {strides = array<i32>} : memref<8x1024xf32, #tpu.memory_space<vmem>>, vector<8x1024xf32>,
    %c0_i32_6 = arith.constant 0 : i32
    %10 = arith.cmpi eq, %arg1, %c0_i32_6 : i32
    %11 = arith.extui %10 : i1 to i32
    %c0_i32_7 = arith.constant 0 : i32
    %12 = arith.cmpi ne, %11, %c0_i32_7 : i32
    scf.if %12 {
      %c0_8 = arith.constant 0 : index
      %c0_9 = arith.constant 0 : index
      %13 = vector.load %arg4[%c0_8, %c0_9] : memref<8x1024xf32, #tpu.memory_space<vmem>>, vector<8x1024xf32>
      %14 = vector.shape_cast %13 : vector<8x1024xf32> to vector<1x8x1024xf32>
      %cst_10 = arith.constant dense<0.000000e+00> : vector<1xf32>
      %15 = vector.multi_reduction <add>, %14, %cst_10 [1, 2] : vector<1x8x1024xf32> to vector<1xf32>
      %16 = vector.shape_cast %15 : vector<1xf32> to vector<1x1x1xf32>
      %17 = vector.extract %16[0, 0, 0] : f32 from vector<1x1x1xf32>
      %18 = vector.broadcast %17 : f32 to vector<8x128xf32>
      %c0_11 = arith.constant 0 : index
      %c0_12 = arith.constant 0 : index
      %19 = vector.load %arg3[%c0_11, %c0_12] : memref<8x128xf32, #tpu.memory_space<vmem>>, vector<8x128xf32>
      tpu.vector_store %arg3[%c0_11, %c0_12], %18 {strides = array<i32>} : memref<8x128xf32, #tpu.memory_space<vmem>>, vector<8x128xf32>,
    } else {
    }
    return
  }
  func.func @transform_0(%arg0: i32, %arg1: i32) -> (i32, i32) {
    %c1_i32 = arith.constant 1 : i32
    %0 = arith.muli %arg0, %c1_i32 : i32
    %1 = arith.addi %0, %arg1 : i32
    %c0_i32 = arith.constant 0 : i32
    %c0_i32_0 = arith.constant 0 : i32
    return %1, %c0_i32 : i32, i32
  }
  func.func @transform_1(%arg0: i32, %arg1: i32) -> (i32, i32) {
    %c0_i32 = arith.constant 0 : i32
    %c0_i32_0 = arith.constant 0 : i32
    return %arg0, %c0_i32 : i32, i32
  }
}

</mosaic_0001>

<llo_original>
// kernel: tpu_custom_call.1
$region0: #{tpu_custom_call.1}
  #allocation0 [shape = 'u32[]', space=smem, size = 0x4, offset = 0x4, fixed_abs, tag = 'smem constant byte address 0x4 - core index']
  #allocation1 [shape = 'u32[72,128]{1,0:T(1,128)}', space=vmem, size = 0x9000, scoped, tag = 'internal scratch']
  #allocation2 [shape = 'f32[8,1024]{1,0:T(8,128)}', space=vmem, size = 0x8000, scoped, tag = 'scratch operand']
  %s0 = inlined_call_operand.hbm [shape: f32[56,1024], index: 0, kind: input, shape index: {}]
  %s1 = inlined_call_operand.hbm [shape: f32[8,128], index: 1, kind: output, shape index: {}]
  %s2 = sld [smem:[#allocation0]]
  $region26: #{tpu_custom_call.1} parent=0
    _
  %s4 = ssub.s32 1, %s2
  %s5 = scalar_select 0, %s4, %s2
  $region1: #{tpu_custom_call.1} parent=0
    #allocation3 [shape = 'u8[229376]{0}', space=vmem, size = 0x38000, scoped, tag = 'input window, operand 0, single buffered']
    #allocation4 [shape = 's32[1]{0}', space=sflag, size = 0x4, scoped, tag = 'scoped memory for tpu_custom_call.1']
    #allocation5 [shape = 's32[1]{0}', space=sflag, size = 0x4, scoped, tag = 'scoped memory for tpu_custom_call.1']
    #allocation6 [shape = 'u8[4096]{0}', space=vmem, size = 0x1000, scoped, tag = 'output window, operand 0, single buffered']
    %6 = vsyncpa [#allocation4], 0
    %7 = vsyncpa [#allocation5], 0
    // Predicated region
    $region2: #{tpu_custom_call.1} parent=1 // pred_check
      _
    $region3: #{tpu_custom_call.1} parent=1 // pred_check_branch
      %9 = sbr.rel (0) target = $region5
    $region4: #{tpu_custom_call.1} parent=1 // pred_region
      %s10 = sadd.s32 0, 0
      %s11 = smul.u32 7, %s10
      %13 = vsyncadd [#allocation4], 0
      %s14 = smul.addr %s11, 8
      %s15 = smul.addr %s14, 8
      %s16 = scalar_lea.hbm %s0, %s15
      %s17 = sshll.u32 %s16, 4
      %s18 = int_to_ptr.hbm [resolvable:$true] %s17
      %s19 = sshll.u32 [#allocation3], 4
      %s20 = int_to_ptr.vmem [resolvable:$true] %s19
      %25 = dma.hbm_to_vmem [thread:$0]  %s18, 7168, %s20, [#allocation4], 1024, 1024, 64
    $region5: #{tpu_custom_call.1} parent=1 // pred_fallthru
      _
    // Predicated region
    $region6: #{tpu_custom_call.1} parent=1 // pred_check
      _
    $region7: #{tpu_custom_call.1} parent=1 // pred_check_branch
      %27 = sbr.rel (0) target = $region9
    $region8: #{tpu_custom_call.1} parent=1 // pred_region
      %29 = dma.done [#allocation4], 7168
    $region9: #{tpu_custom_call.1} parent=1 // pred_fallthru
      _
    %s30 = sadd.s32 0, 0
    %s31 = smul.u32 7, %s30
    %p32 = scmp.eq.s32.totalorder 0, 0
    // Predicated region
    $region10: #{tpu_custom_call.1} parent=1 // pred_check
      %p33 = pneg %p32
    $region11: #{tpu_custom_call.1} parent=1 // pred_check_branch
      %35 = sbr.rel (%p33) target = $region13
    $region12: #{tpu_custom_call.1} parent=1 // pred_region
      %36 = vst [vmem:[#allocation2] sm:$0xff] 0.0
      %37 = vst [vmem:[#allocation2 + $0x8] sm:$0xff] 0.0
      %38 = vst [vmem:[#allocation2 + $0x10] sm:$0xff] 0.0
      %39 = vst [vmem:[#allocation2 + $0x18] sm:$0xff] 0.0
      %40 = vst [vmem:[#allocation2 + $0x20] sm:$0xff] 0.0
      %41 = vst [vmem:[#allocation2 + $0x28] sm:$0xff] 0.0
      %42 = vst [vmem:[#allocation2 + $0x30] sm:$0xff] 0.0
      %43 = vst [vmem:[#allocation2 + $0x38] sm:$0xff] 0.0
    $region13: #{tpu_custom_call.1} parent=1 // pred_fallthru
      _
    %v44 = vld [vmem:[#allocation3] sm:$0xff]
    %v45 = vld [vmem:[#allocation3 + $0x8] sm:$0xff]
    %v46 = vld [vmem:[#allocation3 + $0x10] sm:$0xff]
    %v47 = vld [vmem:[#allocation3 + $0x18] sm:$0xff]
    %v48 = vld [vmem:[#allocation3 + $0x20] sm:$0xff]
    %v49 = vld [vmem:[#allocation3 + $0x28] sm:$0xff]
    %v50 = vld [vmem:[#allocation3 + $0x30] sm:$0xff]
    %v51 = vld [vmem:[#allocation3 + $0x38] sm:$0xff]
    %v52 = vld [vmem:[#allocation3 + $0x40] sm:$0xff]
    %v53 = vld [vmem:[#allocation3 + $0x48] sm:$0xff]
    %v54 = vld [vmem:[#allocation3 + $0x50] sm:$0xff]
    %v55 = vld [vmem:[#allocation3 + $0x58] sm:$0xff]
    %v56 = vld [vmem:[#allocation3 + $0x60] sm:$0xff]
    %v57 = vld [vmem:[#allocation3 + $0x68] sm:$0xff]
    %v58 = vld [vmem:[#allocation3 + $0x70] sm:$0xff]
    %v59 = vld [vmem:[#allocation3 + $0x78] sm:$0xff]
    %v60 = vld [vmem:[#allocation3 + $0x80] sm:$0xff]
    %v61 = vld [vmem:[#allocation3 + $0x88] sm:$0xff]
    %v62 = vld [vmem:[#allocation3 + $0x90] sm:$0xff]
    %v63 = vld [vmem:[#allocation3 + $0x98] sm:$0xff]
    %v64 = vld [vmem:[#allocation3 + $0xa0] sm:$0xff]
    %v65 = vld [vmem:[#allocation3 + $0xa8] sm:$0xff]
    %v66 = vld [vmem:[#allocation3 + $0xb0] sm:$0xff]
    %v67 = vld [vmem:[#allocation3 + $0xb8] sm:$0xff]
    %v68 = vld [vmem:[#allocation3 + $0xc0] sm:$0xff]
    %v69 = vld [vmem:[#allocation3 + $0xc8] sm:$0xff]
    %v70 = vld [vmem:[#allocation3 + $0xd0] sm:$0xff]
    %v71 = vld [vmem:[#allocation3 + $0xd8] sm:$0xff]
    %v72 = vld [vmem:[#allocation3 + $0xe0] sm:$0xff]
    %v73 = vld [vmem:[#allocation3 + $0xe8] sm:$0xff]
    %v74 = vld [vmem:[#allocation3 + $0xf0] sm:$0xff]
    %v75 = vld [vmem:[#allocation3 + $0xf8] sm:$0xff]
    %v76 = vld [vmem:[#allocation3 + $0x100] sm:$0xff]
    %v77 = vld [vmem:[#allocation3 + $0x108] sm:$0xff]
    %v78 = vld [vmem:[#allocation3 + $0x110] sm:$0xff]
    %v79 = vld [vmem:[#allocation3 + $0x118] sm:$0xff]
    %v80 = vld [vmem:[#allocation3 + $0x120] sm:$0xff]
    %v81 = vld [vmem:[#allocation3 + $0x128] sm:$0xff]
    %v82 = vld [vmem:[#allocation3 + $0x130] sm:$0xff]
    %v83 = vld [vmem:[#allocation3 + $0x138] sm:$0xff]
    %v84 = vld [vmem:[#allocation3 + $0x140] sm:$0xff]
    %v85 = vld [vmem:[#allocation3 + $0x148] sm:$0xff]
    %v86 = vld [vmem:[#allocation3 + $0x150] sm:$0xff]
    %v87 = vld [vmem:[#allocation3 + $0x158] sm:$0xff]
    %v88 = vld [vmem:[#allocation3 + $0x160] sm:$0xff]
    %v89 = vld [vmem:[#allocation3 + $0x168] sm:$0xff]
    %v90 = vld [vmem:[#allocation3 + $0x170] sm:$0xff]
    %v91 = vld [vmem:[#allocation3 + $0x178] sm:$0xff]
    %v92 = vld [vmem:[#allocation3 + $0x180] sm:$0xff]
    %v93 = vld [vmem:[#allocation3 + $0x188] sm:$0xff]
    %v94 = vld [vmem:[#allocation3 + $0x190] sm:$0xff]
    %v95 = vld [vmem:[#allocation3 + $0x198] sm:$0xff]
    %v96 = vld [vmem:[#allocation3 + $0x1a0] sm:$0xff]
    %v97 = vld [vmem:[#allocation3 + $0x1a8] sm:$0xff]
    %v98 = vld [vmem:[#allocation3 + $0x1b0] sm:$0xff]
    %v99 = vld [vmem:[#allocation3 + $0x1b8] sm:$0xff]
    %v100 = vmul.f32 %v44, %v44
    %v101 = vmul.f32 %v45, %v45
    %v102 = vmul.f32 %v46, %v46
    %v103 = vmul.f32 %v47, %v47
    %v104 = vmul.f32 %v48, %v48
    %v105 = vmul.f32 %v49, %v49
    %v106 = vmul.f32 %v50, %v50
    %v107 = vmul.f32 %v51, %v51
    %v108 = vmul.f32 %v52, %v52
    %v109 = vmul.f32 %v53, %v53
    %v110 = vmul.f32 %v54, %v54
    %v111 = vmul.f32 %v55, %v55
    %v112 = vmul.f32 %v56, %v56
    %v113 = vmul.f32 %v57, %v57
    %v114 = vmul.f32 %v58, %v58
    %v115 = vmul.f32 %v59, %v59
    %v116 = vmul.f32 %v60, %v60
    %v117 = vmul.f32 %v61, %v61
    %v118 = vmul.f32 %v62, %v62
    %v119 = vmul.f32 %v63, %v63
    %v120 = vmul.f32 %v64, %v64
    %v121 = vmul.f32 %v65, %v65
    %v122 = vmul.f32 %v66, %v66
    %v123 = vmul.f32 %v67, %v67
    %v124 = vmul.f32 %v68, %v68
    %v125 = vmul.f32 %v69, %v69
    %v126 = vmul.f32 %v70, %v70
    %v127 = vmul.f32 %v71, %v71
    %v128 = vmul.f32 %v72, %v72
    %v129 = vmul.f32 %v73, %v73
    %v130 = vmul.f32 %v74, %v74
    %v131 = vmul.f32 %v75, %v75
    %v132 = vmul.f32 %v76, %v76
    %v133 = vmul.f32 %v77, %v77
    %v134 = vmul.f32 %v78, %v78
    %v135 = vmul.f32 %v79, %v79
    %v136 = vmul.f32 %v80, %v80
    %v137 = vmul.f32 %v81, %v81
    %v138 = vmul.f32 %v82, %v82
    %v139 = vmul.f32 %v83, %v83
    %v140 = vmul.f32 %v84, %v84
    %v141 = vmul.f32 %v85, %v85
    %v142 = vmul.f32 %v86, %v86
    %v143 = vmul.f32 %v87, %v87
    %v144 = vmul.f32 %v88, %v88
    %v145 = vmul.f32 %v89, %v89
    %v146 = vmul.f32 %v90, %v90
    %v147 = vmul.f32 %v91, %v91
    %v148 = vmul.f32 %v92, %v92
    %v149 = vmul.f32 %v93, %v93
    %v150 = vmul.f32 %v94, %v94
    %v151 = vmul.f32 %v95, %v95
    %v152 = vmul.f32 %v96, %v96
    %v153 = vmul.f32 %v97, %v97
    %v154 = vmul.f32 %v98, %v98
    %v155 = vmul.f32 %v99, %v99
    %v156 = vld [vmem:[#allocation2] sm:$0xff]
    %v157 = vld [vmem:[#allocation2 + $0x8] sm:$0xff]
    %v158 = vld [vmem:[#allocation2 + $0x10] sm:$0xff]
    %v159 = vld [vmem:[#allocation2 + $0x18] sm:$0xff]
    %v160 = vld [vmem:[#allocation2 + $0x20] sm:$0xff]
    %v161 = vld [vmem:[#allocation2 + $0x28] sm:$0xff]
    %v162 = vld [vmem:[#allocation2 + $0x30] sm:$0xff]
    %v163 = vld [vmem:[#allocation2 + $0x38] sm:$0xff]
    %v164 = vadd.f32 %v100, %v108
    %v165 = vadd.f32 %v164, %v116
    %v166 = vadd.f32 %v165, %v124
    %v167 = vadd.f32 %v166, %v132
    %v168 = vadd.f32 %v167, %v140
    %v169 = vadd.f32 %v168, %v148
    %v170 = vadd.f32 %v101, %v109
    %v171 = vadd.f32 %v170, %v117
    %v172 = vadd.f32 %v171, %v125
    %v173 = vadd.f32 %v172, %v133
    %v174 = vadd.f32 %v173, %v141
    %v175 = vadd.f32 %v174, %v149
    %v176 = vadd.f32 %v102, %v110
    %v177 = vadd.f32 %v176, %v118
    %v178 = vadd.f32 %v177, %v126
    %v179 = vadd.f32 %v178, %v134
    %v180 = vadd.f32 %v179, %v142
    %v181 = vadd.f32 %v180, %v150
    %v182 = vadd.f32 %v103, %v111
    %v183 = vadd.f32 %v182, %v119
    %v184 = vadd.f32 %v183, %v127
    %v185 = vadd.f32 %v184, %v135
    %v186 = vadd.f32 %v185, %v143
    %v187 = vadd.f32 %v186, %v151
    %v188 = vadd.f32 %v104, %v112
    %v189 = vadd.f32 %v188, %v120
    %v190 = vadd.f32 %v189, %v128
    %v191 = vadd.f32 %v190, %v136
    %v192 = vadd.f32 %v191, %v144
    %v193 = vadd.f32 %v192, %v152
    %v194 = vadd.f32 %v105, %v113
    %v195 = vadd.f32 %v194, %v121
    %v196 = vadd.f32 %v195, %v129
    %v197 = vadd.f32 %v196, %v137
    %v198 = vadd.f32 %v197, %v145
    %v199 = vadd.f32 %v198, %v153
    %v200 = vadd.f32 %v106, %v114
    %v201 = vadd.f32 %v200, %v122
    %v202 = vadd.f32 %v201, %v130
    %v203 = vadd.f32 %v202, %v138
    %v204 = vadd.f32 %v203, %v146
    %v205 = vadd.f32 %v204, %v154
    %v206 = vadd.f32 %v107, %v115
    %v207 = vadd.f32 %v206, %v123
    %v208 = vadd.f32 %v207, %v131
    %v209 = vadd.f32 %v208, %v139
    %v210 = vadd.f32 %v209, %v147
    %v211 = vadd.f32 %v210, %v155
    %v212 = vadd.f32 %v156, %v169
    %v213 = vadd.f32 %v157, %v175
    %v214 = vadd.f32 %v158, %v181
    %v215 = vadd.f32 %v159, %v187
    %v216 = vadd.f32 %v160, %v193
    %v217 = vadd.f32 %v161, %v199
    %v218 = vadd.f32 %v162, %v205
    %v219 = vadd.f32 %v163, %v211
    %220 = vst [vmem:[#allocation2] sm:$0xff] %v212
    %221 = vst [vmem:[#allocation2 + $0x8] sm:$0xff] %v213
    %222 = vst [vmem:[#allocation2 + $0x10] sm:$0xff] %v214
    %223 = vst [vmem:[#allocation2 + $0x18] sm:$0xff] %v215
    %224 = vst [vmem:[#allocation2 + $0x20] sm:$0xff] %v216
    %225 = vst [vmem:[#allocation2 + $0x28] sm:$0xff] %v217
    %226 = vst [vmem:[#allocation2 + $0x30] sm:$0xff] %v218
    %227 = vst [vmem:[#allocation2 + $0x38] sm:$0xff] %v219
    // Predicated region
    $region14: #{tpu_custom_call.1} parent=1 // pred_check
      %p228 = pneg %p32
    $region15: #{tpu_custom_call.1} parent=1 // pred_check_branch
      %230 = sbr.rel (%p228) target = $region17
    $region16: #{tpu_custom_call.1} parent=1 // pred_region
      %v231 = vld [vmem:[#allocation2] sm:$0xff]
      %v232 = vld [vmem:[#allocation2 + $0x8] sm:$0xff]
      %v233 = vld [vmem:[#allocation2 + $0x10] sm:$0xff]
      %v234 = vld [vmem:[#allocation2 + $0x18] sm:$0xff]
      %v235 = vld [vmem:[#allocation2 + $0x20] sm:$0xff]
      %v236 = vld [vmem:[#allocation2 + $0x28] sm:$0xff]
      %v237 = vld [vmem:[#allocation2 + $0x30] sm:$0xff]
      %v238 = vld [vmem:[#allocation2 + $0x38] sm:$0xff]
      %v239 = vadd.f32 %v231, %v232
      %v240 = vadd.f32 %v239, %v233
      %v241 = vadd.f32 %v240, %v234
      %v242 = vadd.f32 %v241, %v235
      %v243 = vadd.f32 %v242, %v236
      %v244 = vadd.f32 %v243, %v237
      %v245 = vadd.f32 %v244, %v238
      %246 = vadd.xlane.f32.xlu0 %v245
      %v247 = vpop.xlane.xlu0 %246
      %v248 = vrot.slane %v247, 4
      %v249 = vadd.f32 %v247, %v248
      %v250 = vrot.slane %v249, 2
      %v251 = vadd.f32 %v249, %v250
      %v252 = vrot.slane %v251, 1
      %v253 = vadd.f32 %v251, %v252
      %s254 = vtos %v253
      %v255 = vstv %s254
      %256 = vst [vmem:[#allocation6] sm:$0xff] %v255
    $region17: #{tpu_custom_call.1} parent=1 // pred_fallthru
      _
    // Predicated region
    $region18: #{tpu_custom_call.1} parent=1 // pred_check
      _
    $region19: #{tpu_custom_call.1} parent=1 // pred_check_branch
      %258 = sbr.rel (0) target = $region21
    $region20: #{tpu_custom_call.1} parent=1 // pred_region
      %260 = vsyncadd [#allocation5], 0
      %s262 = sshll.u32 [#allocation6], 4
      %s263 = int_to_ptr.vmem [resolvable:$true] %s262
      %s264 = sshll.u32 %s1, 4
      %s265 = int_to_ptr.hbm [resolvable:$true] %s264
      %267 = dma.vmem_to_hbm [thread:$0]  %s263, 128, %s265, [#allocation5]
    $region21: #{tpu_custom_call.1} parent=1 // pred_fallthru
      _
    // Predicated region
    $region22: #{tpu_custom_call.1} parent=1 // pred_check
      _
    $region23: #{tpu_custom_call.1} parent=1 // pred_check_branch
      %269 = sbr.rel (0) target = $region25
    $region24: #{tpu_custom_call.1} parent=1 // pred_region
      %271 = dma.done [#allocation5], 128
    $region25: #{tpu_custom_call.1} parent=1 // pred_fallthru
      _
    %272 = vsyncpa [#allocation4], 1
    %273 = vsyncpa [#allocation5], 1

</llo_original>
